<compile_context>
chip_gen: v5e
topology: v5e:2x2
jax: 0.10.0
libtpu: 0.0.40
codegen_flags: <defaults>
</compile_context>

<pallas_src>
import functools

import jax
import jax.numpy as jnp
from jax import lax
from jax.experimental import pallas as pl
from jax.experimental.pallas import tpu as pltpu


# ----------------------------------------------------------------------------
# Kernel 1: fused Q/K/V projection (one pass over x).
# ----------------------------------------------------------------------------
def _proj_kernel(x_ref, wq_ref, bq_ref, wk_ref, bk_ref, wv_ref, bv_ref,
                 q_ref, k_ref, v_ref, *, scale):
    x = x_ref[0]                                                    # (ts, Hp) bf16

    q = jnp.dot(x, wq_ref[...], preferred_element_type=jnp.float32) + bq_ref[...]
    q_ref[0] = (q * scale).astype(q_ref.dtype)     # fold 1/sqrt(H) into q, store bf16

    k = jnp.dot(x, wk_ref[...], preferred_element_type=jnp.float32) + bk_ref[...]
    k_ref[0] = k.astype(k_ref.dtype)

    v = jnp.dot(x, wv_ref[...], preferred_element_type=jnp.float32) + bv_ref[...]
    v_ref[0] = v.astype(v_ref.dtype)


# ----------------------------------------------------------------------------
# Kernel 2: flash attention (online softmax) over pre-projected bf16 Q/K/V.
# ----------------------------------------------------------------------------
def _flash_kernel(q_ref, k_ref, v_ref, o_ref, m_sc, l_sc, acc_sc):
    j = pl.program_id(2)                 # KV-tile index (innermost, "arbitrary")
    n_kv = pl.num_programs(2)

    @pl.when(j == 0)
    def _():
        m_sc[...] = jnp.full(m_sc.shape, -jnp.inf, dtype=jnp.float32)
        l_sc[...] = jnp.zeros(l_sc.shape, dtype=jnp.float32)
        acc_sc[...] = jnp.zeros(acc_sc.shape, dtype=jnp.float32)

    # scores = q @ k^T, contraction over the last dims (no XLU transpose of k).
    s = lax.dot_general(q_ref[0], k_ref[0],
                        dimension_numbers=(((1,), (1,)), ((), ())),
                        preferred_element_type=jnp.float32)         # (tq, tk) f32

    # Online softmax (all statistics in f32; portable to v5e).
    m_prev = m_sc[...]
    m_new = jnp.maximum(m_prev, jnp.max(s, axis=-1, keepdims=True))
    alpha = jnp.exp(m_prev - m_new)
    p = jnp.exp(s - m_new)
    l_sc[...] = alpha * l_sc[...] + jnp.sum(p, axis=-1, keepdims=True)
    acc_sc[...] = alpha * acc_sc[...] + jnp.dot(
        p.astype(jnp.bfloat16), v_ref[0], preferred_element_type=jnp.float32)
    m_sc[...] = m_new

    @pl.when(j == n_kv - 1)
    def _():
        inv = pl.reciprocal(l_sc[...], approx=True)       # EUP slot, ~free
        o_ref[0] = (acc_sc[...] * inv).astype(o_ref.dtype)


# ----------------------------------------------------------------------------
# Wrapper.
# ----------------------------------------------------------------------------
def _pick_tile(n, target):
    """Largest divisor of n that is <= target, preferring multiples of 8."""
    if n <= target:
        return n
    aligned = [t for t in range(8, target + 1, 8) if n % t == 0]
    if aligned:
        return max(aligned)
    return max(t for t in range(1, target + 1) if n % t == 0)


def _vmem_limit(nbytes):
    """Actual buffer bytes + headroom, clamped to a v7x-safe range."""
    return int(min(max(nbytes + (8 << 20), 16 << 20), 56 << 20))


def attention_block(x, wq, bq, wk, bk, wv, bv, *, tq=None, tk=None, ts=None):
    """x: (B, S, H) f32; w*: (H, H); b*: (H,). Returns (B, S, H) in x.dtype."""
    B, S, H = x.shape
    out_dtype = x.dtype
    scale = 1.0 / (float(H) ** 0.5)          # uses the ORIGINAL H, as in PyTorch

    # --- pad hidden dim to a multiple of 128 (lane-dense matmuls/stores).
    # Zero-padded weights/biases keep q/k/v exact in the padded columns (all
    # zeros), so scores and the softmax are unchanged; output is sliced back.
    Hp = ((H + 127) // 128) * 128
    if Hp != H:
        ph = Hp - H
        x = jnp.pad(x, ((0, 0), (0, 0), (0, ph)))
        wq = jnp.pad(wq, ((0, ph), (0, ph)))
        wk = jnp.pad(wk, ((0, ph), (0, ph)))
        wv = jnp.pad(wv, ((0, ph), (0, ph)))
        bq = jnp.pad(bq, ((0, ph),))
        bk = jnp.pad(bk, ((0, ph),))
        bv = jnp.pad(bv, ((0, ph),))

    # --- sequence tiling (conservative defaults: good on v5e, MXU-native on
    # v6e/v7x; override via kwargs for generation-specific tuning).
    if ts is None:
        ts = _pick_tile(S, 256)     # projection row tile
    if tq is None:
        tq = _pick_tile(S, 128)     # query-row tile
    if tk is None:
        tk = _pick_tile(S, 256)     # kv-row tile
    assert S % ts == 0 and S % tq == 0 and S % tk == 0, \
        "seq_len must be divisible by tile sizes"

    # --- one-time casts in the wrapper (halve HBM traffic / VMEM for x & W,
    # remove per-step in-kernel casts).
    x_bf = x.astype(jnp.bfloat16)
    wq_bf = wq.astype(jnp.bfloat16)
    wk_bf = wk.astype(jnp.bfloat16)
    wv_bf = wv.astype(jnp.bfloat16)
    # Biases stay f32 (added to the f32 MXU accumulator); keep them 2D (1, Hp).
    bq2 = bq.reshape(1, Hp).astype(jnp.float32)
    bk2 = bk.reshape(1, Hp).astype(jnp.float32)
    bv2 = bv.reshape(1, Hp).astype(jnp.float32)

    # ---------------- pass 1: Q/K/V projection ----------------
    x_spec = pl.BlockSpec((1, ts, Hp), lambda b, i: (b, i, 0))
    w_spec = pl.BlockSpec((Hp, Hp), lambda b, i: (0, 0))    # constant -> fetched once
    b_spec = pl.BlockSpec((1, Hp), lambda b, i: (0, 0))
    qkv_spec = pl.BlockSpec((1, ts, Hp), lambda b, i: (b, i, 0))

    proj_bytes = (2 * ts * Hp * 2                 # x tile (double-buffered, bf16)
                  + 3 * 2 * Hp * Hp * 2           # weights (bf16)
                  + 3 * 2 * Hp * 4                # biases (f32)
                  + 3 * 2 * ts * Hp * 2)          # q/k/v output tiles (bf16)

    proj = pl.pallas_call(
        functools.partial(_proj_kernel, scale=scale),
        out_shape=(jax.ShapeDtypeStruct((B, S, Hp), jnp.bfloat16),
                   jax.ShapeDtypeStruct((B, S, Hp), jnp.bfloat16),
                   jax.ShapeDtypeStruct((B, S, Hp), jnp.bfloat16)),
        grid_spec=pltpu.PrefetchScalarGridSpec(
            num_scalar_prefetch=0,
            grid=(B, S // ts),
            in_specs=[x_spec,
                      w_spec, b_spec,     # query projection
                      w_spec, b_spec,     # key projection
                      w_spec, b_spec],    # value projection
            out_specs=[qkv_spec, qkv_spec, qkv_spec],
        ),
        compiler_params=pltpu.CompilerParams(
            dimension_semantics=("parallel", "parallel"),
            vmem_limit_bytes=_vmem_limit(proj_bytes)),
    )
    q_s, k_p, v_p = proj(x_bf, wq_bf, bq2, wk_bf, bk2, wv_bf, bv2)

    # ---------------- pass 2: flash attention ----------------
    attn_bytes = (2 * tq * Hp * 2                 # q tile (bf16)
                  + 2 * tk * Hp * 2 * 2           # k, v tiles (bf16)
                  + 2 * tq * Hp * 4               # output tile (f32)
                  + tq * Hp * 4 + 2 * tq * 4)     # acc / m / l scratch

    attn = pl.pallas_call(
        _flash_kernel,
        out_shape=jax.ShapeDtypeStruct((B, S, Hp), out_dtype),
        grid_spec=pltpu.PrefetchScalarGridSpec(
            num_scalar_prefetch=0,
            grid=(B, S // tq, S // tk),
            in_specs=[
                pl.BlockSpec((1, tq, Hp), lambda b, i, j: (b, i, 0)),
                pl.BlockSpec((1, tk, Hp), lambda b, i, j: (b, j, 0)),
                pl.BlockSpec((1, tk, Hp), lambda b, i, j: (b, j, 0)),
            ],
            out_specs=pl.BlockSpec((1, tq, Hp), lambda b, i, j: (b, i, 0)),
            scratch_shapes=[
                pltpu.VMEM((tq, 1), jnp.float32),    # running max
                pltpu.VMEM((tq, 1), jnp.float32),    # running denominator
                pltpu.VMEM((tq, Hp), jnp.float32),   # output accumulator
            ],
        ),
        compiler_params=pltpu.CompilerParams(
            dimension_semantics=("parallel", "parallel", "arbitrary"),
            vmem_limit_bytes=_vmem_limit(attn_bytes)),
    )
    out = attn(q_s, k_p, v_p)

    if Hp != H:
        out = out[..., :H]
    return out


# ----------------------------------------------------------------------------
# Reference + self-test.
# ----------------------------------------------------------------------------
def _reference(x, wq, bq, wk, bk, wv, bv):
    """Pure-JAX (f32) reference matching the PyTorch forward pass."""
    H = x.shape[-1]
    q = x @ wq + bq
    k = x @ wk + bk
    v = x @ wv + bv
    scores = jnp.einsum("bsh,bth->bst", q, k) / jnp.sqrt(jnp.float32(H))
    attn = jax.nn.softmax(scores, axis=2)
    return jnp.einsum("bst,bth->bsh", attn, v)


def _make_inputs(key, B, S, H):
    kx, kq, kbq, kk, kbk, kv, kbv = jax.random.split(key, 7)
    x = jax.random.normal(kx, (B, S, H), dtype=jnp.float32)
    wq = jax.random.normal(kq, (H, H), dtype=jnp.float32) * 0.1
    bq = jax.random.normal(kbq, (H,), dtype=jnp.float32) * 0.1
    wk = jax.random.normal(kk, (H, H), dtype=jnp.float32) * 0.1
    bk = jax.random.normal(kbk, (H,), dtype=jnp.float32) * 0.1
    wv = jax.random.normal(kv, (H, H), dtype=jnp.float32) * 0.1
    bv = jax.random.normal(kbv, (H,), dtype=jnp.float32) * 0.1
    return x, wq, bq, wk, bk, wv, bv


if __name__ == "__main__":
    key = jax.random.PRNGKey(0)
    k1, k2 = jax.random.split(key)

    # --- small shape matching the module's (batch, seq_len, hidden_dim) input.
    # H=32 exercises the pad-to-128 lane-dense path.
    B, S, H = 2, 8, 32
    args = _make_inputs(k1, B, S, H)
    out = jax.block_until_ready(attention_block(*args))
    ref = _reference(*args)
    assert out.shape == (B, S, H)
    # bf16 MXU operands / bf16 Q,K,V (f32 accumulation) -> loose tolerance.
    assert jnp.allclose(out, ref, atol=3e-2, rtol=3e-2), "mismatch vs reference (small)"

    # --- larger, 128-aligned shape exercising the multi-tile online-softmax
    # path (attention grid = (2, 4, 2), projection grid = (2, 2)).
    B2, S2, H2 = 2, 512, 128
    args2 = _make_inputs(k2, B2, S2, H2)
    out2 = jax.block_until_ready(attention_block(*args2))
    ref2 = _reference(*args2)
    assert out2.shape == (B2, S2, H2)
    assert jnp.allclose(out2, ref2, atol=5e-2, rtol=5e-2), "mismatch vs reference (tiled)"

    print("KERNEL_OK")
</pallas_src>

<mosaic_0001>
module attributes {stable_mosaic.version = 11 : i64} {
  func.func @_proj_kernel(%arg0: i32, %arg1: i32, %arg2: memref<1x8x128xbf16, #tpu.memory_space<vmem>>, %arg3: memref<128x128xbf16, #tpu.memory_space<vmem>>, %arg4: memref<1x128xf32, #tpu.memory_space<vmem>>, %arg5: memref<128x128xbf16, #tpu.memory_space<vmem>>, %arg6: memref<1x128xf32, #tpu.memory_space<vmem>>, %arg7: memref<128x128xbf16, #tpu.memory_space<vmem>>, %arg8: memref<1x128xf32, #tpu.memory_space<vmem>>, %arg9: memref<1x8x128xbf16, #tpu.memory_space<vmem>>, %arg10: memref<1x8x128xbf16, #tpu.memory_space<vmem>>, %arg11: memref<1x8x128xbf16, #tpu.memory_space<vmem>>) attributes {dimension_semantics = [#tpu.dimension_semantics<parallel>, #tpu.dimension_semantics<parallel>], iteration_bounds = array<i64: 2, 1>, scalar_prefetch = 0 : i64, scratch_operands = 0 : i64, tpu.core_type = #tpu.core_type<tc>, window_params = [{transform_indices = @transform_0, window_bounds = array<i64: 1, 8, 128>}, {pipeline_mode = #tpu.pipeline_mode<synchronous>, transform_indices = @transform_1, window_bounds = array<i64: 128, 128>}, {pipeline_mode = #tpu.pipeline_mode<synchronous>, transform_indices = @transform_2, window_bounds = array<i64: 1, 128>}, {pipeline_mode = #tpu.pipeline_mode<synchronous>, transform_indices = @transform_3, window_bounds = array<i64: 128, 128>}, {pipeline_mode = #tpu.pipeline_mode<synchronous>, transform_indices = @transform_4, window_bounds = array<i64: 1, 128>}, {pipeline_mode = #tpu.pipeline_mode<synchronous>, transform_indices = @transform_5, window_bounds = array<i64: 128, 128>}, {pipeline_mode = #tpu.pipeline_mode<synchronous>, transform_indices = @transform_6, window_bounds = array<i64: 1, 128>}, {transform_indices = @transform_7, window_bounds = array<i64: 1, 8, 128>}, {transform_indices = @transform_8, window_bounds = array<i64: 1, 8, 128>}, {transform_indices = @transform_9, window_bounds = array<i64: 1, 8, 128>}]} {
    %c0 = arith.constant 0 : index
    %c0_0 = arith.constant 0 : index
    %c0_1 = arith.constant 0 : index
    %0 = vector.load %arg2[%c0, %c0_0, %c0_1] : memref<1x8x128xbf16, #tpu.memory_space<vmem>>, vector<1x8x128xbf16>
    %1 = vector.shape_cast %0 : vector<1x8x128xbf16> to vector<8x128xbf16>
    %c0_2 = arith.constant 0 : index
    %c0_3 = arith.constant 0 : index
    %2 = vector.load %arg3[%c0_2, %c0_3] : memref<128x128xbf16, #tpu.memory_space<vmem>>, vector<128x128xbf16>
    %cst = arith.constant dense<0.000000e+00> : vector<8x128xf32>
    %3 = tpu.matmul %1, %2, %cst {dimension_numbers = #tpu.dot_dimension_numbers<[1], [0], [0], [1], [0, 0, 1, 1], [], []>} : vector<8x128xbf16>, vector<128x128xbf16>, vector<8x128xf32> -> vector<8x128xf32>
    %c0_4 = arith.constant 0 : index
    %c0_5 = arith.constant 0 : index
    %4 = vector.load %arg4[%c0_4, %c0_5] : memref<1x128xf32, #tpu.memory_space<vmem>>, vector<1x128xf32>
    %5 = vector.broadcast %4 : vector<1x128xf32> to vector<8x128xf32>
    %6 = arith.addf %3, %5 : vector<8x128xf32>
    %cst_6 = arith.constant 0.176776692 : f32
    %7 = vector.broadcast %cst_6 : f32 to vector<8x128xf32>
    %8 = arith.mulf %6, %7 : vector<8x128xf32>
    %9 = arith.truncf %8 : vector<8x128xf32> to vector<8x128xbf16>
    %c0_7 = arith.constant 0 : index
    %c0_8 = arith.constant 0 : index
    %c0_9 = arith.constant 0 : index
    %10 = vector.load %arg9[%c0_7, %c0_8, %c0_9] : memref<1x8x128xbf16, #tpu.memory_space<vmem>>, vector<1x8x128xbf16>
    %11 = vector.shape_cast %10 : vector<1x8x128xbf16> to vector<8x128xbf16>
    %12 = vector.shape_cast %9 : vector<8x128xbf16> to vector<1x8x128xbf16>
    tpu.vector_store %arg9[%c0_7, %c0_8, %c0_9], %12 {strides = array<i32>} : memref<1x8x128xbf16, #tpu.memory_space<vmem>>, vector<1x8x128xbf16>,
    %c0_10 = arith.constant 0 : index
    %c0_11 = arith.constant 0 : index
    %13 = vector.load %arg5[%c0_10, %c0_11] : memref<128x128xbf16, #tpu.memory_space<vmem>>, vector<128x128xbf16>
    %cst_12 = arith.constant dense<0.000000e+00> : vector<8x128xf32>
    %14 = tpu.matmul %1, %13, %cst_12 {dimension_numbers = #tpu.dot_dimension_numbers<[1], [0], [0], [1], [0, 0, 1, 1], [], []>} : vector<8x128xbf16>, vector<128x128xbf16>, vector<8x128xf32> -> vector<8x128xf32>
    %c0_13 = arith.constant 0 : index
    %c0_14 = arith.constant 0 : index
    %15 = vector.load %arg6[%c0_13, %c0_14] : memref<1x128xf32, #tpu.memory_space<vmem>>, vector<1x128xf32>
    %16 = vector.broadcast %15 : vector<1x128xf32> to vector<8x128xf32>
    %17 = arith.addf %14, %16 : vector<8x128xf32>
    %18 = arith.truncf %17 : vector<8x128xf32> to vector<8x128xbf16>
    %c0_15 = arith.constant 0 : index
    %c0_16 = arith.constant 0 : index
    %c0_17 = arith.constant 0 : index
    %19 = vector.load %arg10[%c0_15, %c0_16, %c0_17] : memref<1x8x128xbf16, #tpu.memory_space<vmem>>, vector<1x8x128xbf16>
    %20 = vector.shape_cast %19 : vector<1x8x128xbf16> to vector<8x128xbf16>
    %21 = vector.shape_cast %18 : vector<8x128xbf16> to vector<1x8x128xbf16>
    tpu.vector_store %arg10[%c0_15, %c0_16, %c0_17], %21 {strides = array<i32>} : memref<1x8x128xbf16, #tpu.memory_space<vmem>>, vector<1x8x128xbf16>,
    %c0_18 = arith.constant 0 : index
    %c0_19 = arith.constant 0 : index
    %22 = vector.load %arg7[%c0_18, %c0_19] : memref<128x128xbf16, #tpu.memory_space<vmem>>, vector<128x128xbf16>
    %cst_20 = arith.constant dense<0.000000e+00> : vector<8x128xf32>
    %23 = tpu.matmul %1, %22, %cst_20 {dimension_numbers = #tpu.dot_dimension_numbers<[1], [0], [0], [1], [0, 0, 1, 1], [], []>} : vector<8x128xbf16>, vector<128x128xbf16>, vector<8x128xf32> -> vector<8x128xf32>
    %c0_21 = arith.constant 0 : index
    %c0_22 = arith.constant 0 : index
    %24 = vector.load %arg8[%c0_21, %c0_22] : memref<1x128xf32, #tpu.memory_space<vmem>>, vector<1x128xf32>
    %25 = vector.broadcast %24 : vector<1x128xf32> to vector<8x128xf32>
    %26 = arith.addf %23, %25 : vector<8x128xf32>
    %27 = arith.truncf %26 : vector<8x128xf32> to vector<8x128xbf16>
    %c0_23 = arith.constant 0 : index
    %c0_24 = arith.constant 0 : index
    %c0_25 = arith.constant 0 : index
    %28 = vector.load %arg11[%c0_23, %c0_24, %c0_25] : memref<1x8x128xbf16, #tpu.memory_space<vmem>>, vector<1x8x128xbf16>
    %29 = vector.shape_cast %28 : vector<1x8x128xbf16> to vector<8x128xbf16>
    %30 = vector.shape_cast %27 : vector<8x128xbf16> to vector<1x8x128xbf16>
    tpu.vector_store %arg11[%c0_23, %c0_24, %c0_25], %30 {strides = array<i32>} : memref<1x8x128xbf16, #tpu.memory_space<vmem>>, vector<1x8x128xbf16>,
    return
  }
  func.func @transform_0(%arg0: i32, %arg1: i32) -> (i32, i32, i32) {
    %c0_i32 = arith.constant 0 : i32
    %c0_i32_0 = arith.constant 0 : i32
    return %arg0, %arg1, %c0_i32 : i32, i32, i32
  }
  func.func @transform_1(%arg0: i32, %arg1: i32) -> (i32, i32) {
    %c0_i32 = arith.constant 0 : i32
    %c0_i32_0 = arith.constant 0 : i32
    %c0_i32_1 = arith.constant 0 : i32
    return %c0_i32, %c0_i32_0 : i32, i32
  }
  func.func @transform_2(%arg0: i32, %arg1: i32) -> (i32, i32) {
    %c0_i32 = arith.constant 0 : i32
    %c0_i32_0 = arith.constant 0 : i32
    %c0_i32_1 = arith.constant 0 : i32
    return %c0_i32, %c0_i32_0 : i32, i32
  }
  func.func @transform_3(%arg0: i32, %arg1: i32) -> (i32, i32) {
    %c0_i32 = arith.constant 0 : i32
    %c0_i32_0 = arith.constant 0 : i32
    %c0_i32_1 = arith.constant 0 : i32
    return %c0_i32, %c0_i32_0 : i32, i32
  }
  func.func @transform_4(%arg0: i32, %arg1: i32) -> (i32, i32) {
    %c0_i32 = arith.constant 0 : i32
    %c0_i32_0 = arith.constant 0 : i32
    %c0_i32_1 = arith.constant 0 : i32
    return %c0_i32, %c0_i32_0 : i32, i32
  }
  func.func @transform_5(%arg0: i32, %arg1: i32) -> (i32, i32) {
    %c0_i32 = arith.constant 0 : i32
    %c0_i32_0 = arith.constant 0 : i32
    %c0_i32_1 = arith.constant 0 : i32
    return %c0_i32, %c0_i32_0 : i32, i32
  }
  func.func @transform_6(%arg0: i32, %arg1: i32) -> (i32, i32) {
    %c0_i32 = arith.constant 0 : i32
    %c0_i32_0 = arith.constant 0 : i32
    %c0_i32_1 = arith.constant 0 : i32
    return %c0_i32, %c0_i32_0 : i32, i32
  }
  func.func @transform_7(%arg0: i32, %arg1: i32) -> (i32, i32, i32) {
    %c0_i32 = arith.constant 0 : i32
    %c0_i32_0 = arith.constant 0 : i32
    return %arg0, %arg1, %c0_i32 : i32, i32, i32
  }
  func.func @transform_8(%arg0: i32, %arg1: i32) -> (i32, i32, i32) {
    %c0_i32 = arith.constant 0 : i32
    %c0_i32_0 = arith.constant 0 : i32
    return %arg0, %arg1, %c0_i32 : i32, i32, i32
  }
  func.func @transform_9(%arg0: i32, %arg1: i32) -> (i32, i32, i32) {
    %c0_i32 = arith.constant 0 : i32
    %c0_i32_0 = arith.constant 0 : i32
    return %arg0, %arg1, %c0_i32 : i32, i32, i32
  }
}

</mosaic_0001>

<llo_original>
// kernel: tpu_custom_call.1
$region0: #{tpu_custom_call.1}
  #allocation0 [shape = 'u32[]', space=smem, size = 0x4, offset = 0x4, fixed_abs, tag = 'smem constant byte address 0x4 - core index']
  #allocation1 [shape = 'u32[72,128]{1,0:T(1,128)}', space=vmem, size = 0x9000, scoped, tag = 'internal scratch']
  %s0 = inlined_call_operand.hbm [shape: bf16[2,8,128], index: 0, kind: input, shape index: {}]
  %s1 = inlined_call_operand.hbm [shape: bf16[128,128], index: 1, kind: input, shape index: {}]
  %s2 = inlined_call_operand.vmem [shape: f32[1,128], index: 2, kind: input, shape index: {}]
  %s3 = inlined_call_operand.hbm [shape: bf16[128,128], index: 3, kind: input, shape index: {}]
  %s4 = inlined_call_operand.vmem [shape: f32[1,128], index: 4, kind: input, shape index: {}]
  %s5 = inlined_call_operand.hbm [shape: bf16[128,128], index: 5, kind: input, shape index: {}]
  %s6 = inlined_call_operand.vmem [shape: f32[1,128], index: 6, kind: input, shape index: {}]
  %s7 = inlined_call_operand.hbm [shape: bf16[2,8,128], index: 7, kind: output, shape index: {0}]
  %s8 = inlined_call_operand.hbm [shape: bf16[2,8,128], index: 8, kind: output, shape index: {1}]
  %s9 = inlined_call_operand.hbm [shape: bf16[2,8,128], index: 9, kind: output, shape index: {2}]
  %10 = xla_tuple %s7, %s8, %s9
  %s11 = sld [smem:[#allocation0]]
  $region93: #{tpu_custom_call.1} parent=0
    _
  %s13 = ssub.s32 1, %s11
  %s14 = scalar_select 0, %s13, %s11
  $region1: #{tpu_custom_call.1} parent=0
    #allocation2 [shape = 'u8[4096]{0}', space=vmem, size = 0x1000, scoped, tag = 'input window, operand 0']
    #allocation3 [shape = 's32[2]{0}', space=sflag, size = 0x8, scoped, tag = 'scoped memory for tpu_custom_call.1']
    #allocation4 [shape = 's32[2]{0}', space=sflag, size = 0x8, scoped, tag = 'scoped memory for tpu_custom_call.1']
    #allocation5 [shape = 'u8[32768]{0}', space=vmem, size = 0x8000, scoped, tag = 'input window, operand 1, single buffered']
    #allocation6 [shape = 's32[1]{0}', space=sflag, size = 0x4, scoped, tag = 'scoped memory for tpu_custom_call.1']
    #allocation7 [shape = 'u8[32768]{0}', space=vmem, size = 0x8000, scoped, tag = 'input window, operand 3, single buffered']
    #allocation8 [shape = 'u8[32768]{0}', space=vmem, size = 0x8000, scoped, tag = 'input window, operand 5, single buffered']
    #allocation9 [shape = 's32[1]{0}', space=sflag, size = 0x4, scoped, tag = 'scoped memory for tpu_custom_call.1']
    #allocation10 [shape = 'u8[4096]{0}', space=vmem, size = 0x1000, scoped, tag = 'output window, operand 0']
    #allocation11 [shape = 'u8[4096]{0}', space=vmem, size = 0x1000, scoped, tag = 'output window, operand 1']
    #allocation12 [shape = 's32[2]{0}', space=sflag, size = 0x8, scoped, tag = 'scoped memory for tpu_custom_call.1']
    #allocation13 [shape = 'u8[4096]{0}', space=vmem, size = 0x1000, scoped, tag = 'output window, operand 2']
    %15 = vsyncpa [#allocation3], 0
    %s16 = scalar_lea.sflag [#allocation3], 1
    %17 = vsyncpa %s16, 0
    %18 = vsyncpa [#allocation6], 0
    %19 = vsyncpa [#allocation9], 0
    %20 = vsyncpa [#allocation4], 0
    %s21 = scalar_lea.sflag [#allocation4], 1
    %22 = vsyncpa %s21, 0
    %23 = vsyncpa [#allocation12], 0
    %s24 = scalar_lea.sflag [#allocation12], 1
    %25 = vsyncpa %s24, 0
    loop: start=0, step=1, limit=4
    $region2: #{tpu_custom_call.1} parent=1 // loop_pre_header
      _
    $region3: #{tpu_custom_call.1} parent=1 // loop_header
      %s27 = sphi 0, %s31
      %p28 = scmp.ge.s32.totalorder %s27, 4
      %s34 = sphi 0, %s46
      %s35 = sphi 0, %s42
      %s36 = sphi 0, %s34
      %s37 = sphi 0, %s35
      %s38 = sphi 0, %s36
      %s39 = sphi 0, %s37
      %s51 = sphi 0, %s53
      %s54 = sphi 0, %s51
      %s55 = sphi 0, %s54
      %s71 = sphi 0, %s55
      %s75 = sphi 0, %s75
      %s77 = sphi 0, %s75
      %s78 = sphi 0, %s77
      %s92 = sphi 0, %s78
      %s96 = sphi 0, %s96
      %s98 = sphi 0, %s96
      %s99 = sphi 0, %s98
      %s113 = sphi 0, %s99
      %s117 = sphi 0, %s117
      %s119 = sphi 0, %s117
      %s120 = sphi 0, %s119
      %s134 = sphi 0, %s120
      %s138 = sphi 0, %s138
      %s140 = sphi 0, %s138
      %s141 = sphi 0, %s140
      %s155 = sphi 0, %s141
      %s159 = sphi 0, %s159
      %s161 = sphi 0, %s159
      %s162 = sphi 0, %s161
      %s176 = sphi 0, %s162
      %s180 = sphi 0, %s180
      %s182 = sphi 0, %s180
      %s183 = sphi 0, %s182
      %s197 = sphi 0, %s183
      %s205 = sphi 0, %s207
      %s208 = sphi 0, %s205
      %s209 = sphi 0, %s208
      %s225 = sphi 0, %s209
      %s233 = sphi 0, %s235
      %s236 = sphi 0, %s233
      %s237 = sphi 0, %s236
      %s253 = sphi 0, %s237
      %s261 = sphi 0, %s263
      %s264 = sphi 0, %s261
      %s265 = sphi 0, %s264
      %s281 = sphi 0, %s265
    $region4: #{tpu_custom_call.1} parent=1 // loop_header_branch
      %30 = sbr.rel (%p28) target = $region8
    $region5: #{tpu_custom_call.1} parent=1 // loop_body
      %s32 = ssub.s32 %s27, 1
      %s33 = ssub.s32 %s27, 2
      %s40 = sadd.s32 1, %s35
      %p41 = scmp.ge.s32.totalorder %s40, 1
      %s42 = scalar_select %p41, 0, %s40
      %s43 = sadd.s32 1, %s34
      %s44 = scalar_select %p41, %s43, %s34
      %p45 = scmp.ge.s32.totalorder %s44, 2
      %s46 = scalar_select %p45, 0, %s44
      %s47 = ssub.s32 %s34, %s46
      %s48 = ssub.s32 %s35, %s42
      %s49 = sor.u32 %s47, %s48
      %p50 = scmp.eq.s32.totalorder %s49, 0
      %s52 = sadd.s32 %s51, 1
      %s53 = scalar_select %p50, %s51, %s52
      %p56 = pneg %p50
      %p57 = scmp.eq.s32.totalorder %s27, 1
      %p58 = por %p56, %p57
      %p59 = scmp.ne.s32.totalorder %s51, %s54
      %p60 = scmp.eq.s32.totalorder %s27, 0
      %p61 = por %p59, %p60
      %p62 = scmp.ne.s32.totalorder %s51, %s54
      %p63 = scmp.eq.s32.totalorder %s32, 1
      %p64 = por %p62, %p63
      %p65 = scmp.ne.s32.totalorder %s54, %s55
      %p66 = scmp.eq.s32.totalorder %s32, 0
      %p67 = por %p65, %p66
      %p68 = scmp.ne.s32.totalorder %s54, %s55
      %p69 = scmp.eq.s32.totalorder %s33, 1
      %p70 = por %p68, %p69
      %p72 = scmp.ne.s32.totalorder %s55, %s71
      %p73 = scmp.eq.s32.totalorder %s33, 0
      %p74 = por %p72, %p73
      %s76 = sadd.s32 %s75, 1
      %p79 = scmp.eq.s32.totalorder %s27, 1
      %p80 = scmp.ne.s32.totalorder %s75, %s77
      %p81 = scmp.eq.s32.totalorder %s27, 0
      %p82 = por %p80, %p81
      %p83 = scmp.ne.s32.totalorder %s75, %s77
      %p84 = scmp.eq.s32.totalorder %s32, 1
      %p85 = por %p83, %p84
      %p86 = scmp.ne.s32.totalorder %s77, %s78
      %p87 = scmp.eq.s32.totalorder %s32, 0
      %p88 = por %p86, %p87
      %p89 = scmp.ne.s32.totalorder %s77, %s78
      %p90 = scmp.eq.s32.totalorder %s33, 1
      %p91 = por %p89, %p90
      %p93 = scmp.ne.s32.totalorder %s78, %s92
      %p94 = scmp.eq.s32.totalorder %s33, 0
      %p95 = por %p93, %p94
      %s97 = sadd.s32 %s96, 1
      %p100 = scmp.eq.s32.totalorder %s27, 1
      %p101 = scmp.ne.s32.totalorder %s96, %s98
      %p102 = scmp.eq.s32.totalorder %s27, 0
      %p103 = por %p101, %p102
      %p104 = scmp.ne.s32.totalorder %s96, %s98
      %p105 = scmp.eq.s32.totalorder %s32, 1
      %p106 = por %p104, %p105
      %p107 = scmp.ne.s32.totalorder %s98, %s99
      %p108 = scmp.eq.s32.totalorder %s32, 0
      %p109 = por %p107, %p108
      %p110 = scmp.ne.s32.totalorder %s98, %s99
      %p111 = scmp.eq.s32.totalorder %s33, 1
      %p112 = por %p110, %p111
      %p114 = scmp.ne.s32.totalorder %s99, %s113
      %p115 = scmp.eq.s32.totalorder %s33, 0
      %p116 = por %p114, %p115
      %s118 = sadd.s32 %s117, 1
      %p121 = scmp.eq.s32.totalorder %s27, 1
      %p122 = scmp.ne.s32.totalorder %s117, %s119
      %p123 = scmp.eq.s32.totalorder %s27, 0
      %p124 = por %p122, %p123
      %p125 = scmp.ne.s32.totalorder %s117, %s119
      %p126 = scmp.eq.s32.totalorder %s32, 1
      %p127 = por %p125, %p126
      %p128 = scmp.ne.s32.totalorder %s119, %s120
      %p129 = scmp.eq.s32.totalorder %s32, 0
      %p130 = por %p128, %p129
      %p131 = scmp.ne.s32.totalorder %s119, %s120
      %p132 = scmp.eq.s32.totalorder %s33, 1
      %p133 = por %p131, %p132
      %p135 = scmp.ne.s32.totalorder %s120, %s134
      %p136 = scmp.eq.s32.totalorder %s33, 0
      %p137 = por %p135, %p136
      %s139 = sadd.s32 %s138, 1
      %p142 = scmp.eq.s32.totalorder %s27, 1
      %p143 = scmp.ne.s32.totalorder %s138, %s140
      %p144 = scmp.eq.s32.totalorder %s27, 0
      %p145 = por %p143, %p144
      %p146 = scmp.ne.s32.totalorder %s138, %s140
      %p147 = scmp.eq.s32.totalorder %s32, 1
      %p148 = por %p146, %p147
      %p149 = scmp.ne.s32.totalorder %s140, %s141
      %p150 = scmp.eq.s32.totalorder %s32, 0
      %p151 = por %p149, %p150
      %p152 = scmp.ne.s32.totalorder %s140, %s141
      %p153 = scmp.eq.s32.totalorder %s33, 1
      %p154 = por %p152, %p153
      %p156 = scmp.ne.s32.totalorder %s141, %s155
      %p157 = scmp.eq.s32.totalorder %s33, 0
      %p158 = por %p156, %p157
      %s160 = sadd.s32 %s159, 1
      %p163 = scmp.eq.s32.totalorder %s27, 1
      %p164 = scmp.ne.s32.totalorder %s159, %s161
      %p165 = scmp.eq.s32.totalorder %s27, 0
      %p166 = por %p164, %p165
      %p167 = scmp.ne.s32.totalorder %s159, %s161
      %p168 = scmp.eq.s32.totalorder %s32, 1
      %p169 = por %p167, %p168
      %p170 = scmp.ne.s32.totalorder %s161, %s162
      %p171 = scmp.eq.s32.totalorder %s32, 0
      %p172 = por %p170, %p171
      %p173 = scmp.ne.s32.totalorder %s161, %s162
      %p174 = scmp.eq.s32.totalorder %s33, 1
      %p175 = por %p173, %p174
      %p177 = scmp.ne.s32.totalorder %s162, %s176
      %p178 = scmp.eq.s32.totalorder %s33, 0
      %p179 = por %p177, %p178
      %s181 = sadd.s32 %s180, 1
      %p184 = scmp.eq.s32.totalorder %s27, 1
      %p185 = scmp.ne.s32.totalorder %s180, %s182
      %p186 = scmp.eq.s32.totalorder %s27, 0
      %p187 = por %p185, %p186
      %p188 = scmp.ne.s32.totalorder %s180, %s182
      %p189 = scmp.eq.s32.totalorder %s32, 1
      %p190 = por %p188, %p189
      %p191 = scmp.ne.s32.totalorder %s182, %s183
      %p192 = scmp.eq.s32.totalorder %s32, 0
      %p193 = por %p191, %p192
      %p194 = scmp.ne.s32.totalorder %s182, %s183
      %p195 = scmp.eq.s32.totalorder %s33, 1
      %p196 = por %p194, %p195
      %p198 = scmp.ne.s32.totalorder %s183, %s197
      %p199 = scmp.eq.s32.totalorder %s33, 0
      %p200 = por %p198, %p199
      %s201 = ssub.s32 %s34, %s46
      %s202 = ssub.s32 %s35, %s42
      %s203 = sor.u32 %s201, %s202
      %p204 = scmp.eq.s32.totalorder %s203, 0
      %s206 = sadd.s32 %s205, 1
      %s207 = scalar_select %p204, %s205, %s206
      %p210 = pneg %p204
      %p211 = scmp.eq.s32.totalorder %s27, 1
      %p212 = por %p210, %p211
      %p213 = scmp.ne.s32.totalorder %s205, %s208
      %p214 = scmp.eq.s32.totalorder %s27, 0
      %p215 = por %p213, %p214
      %p216 = scmp.ne.s32.totalorder %s205, %s208
      %p217 = scmp.eq.s32.totalorder %s32, 1
      %p218 = por %p216, %p217
      %p219 = scmp.ne.s32.totalorder %s208, %s209
      %p220 = scmp.eq.s32.totalorder %s32, 0
      %p221 = por %p219, %p220
      %p222 = scmp.ne.s32.totalorder %s208, %s209
      %p223 = scmp.eq.s32.totalorder %s33, 1
      %p224 = por %p222, %p223
      %p226 = scmp.ne.s32.totalorder %s209, %s225
      %p227 = scmp.eq.s32.totalorder %s33, 0
      %p228 = por %p226, %p227
      %s229 = ssub.s32 %s34, %s46
      %s230 = ssub.s32 %s35, %s42
      %s231 = sor.u32 %s229, %s230
      %p232 = scmp.eq.s32.totalorder %s231, 0
      %s234 = sadd.s32 %s233, 1
      %s235 = scalar_select %p232, %s233, %s234
      %p238 = pneg %p232
      %p239 = scmp.eq.s32.totalorder %s27, 1
      %p240 = por %p238, %p239
      %p241 = scmp.ne.s32.totalorder %s233, %s236
      %p242 = scmp.eq.s32.totalorder %s27, 0
      %p243 = por %p241, %p242
      %p244 = scmp.ne.s32.totalorder %s233, %s236
      %p245 = scmp.eq.s32.totalorder %s32, 1
      %p246 = por %p244, %p245
      %p247 = scmp.ne.s32.totalorder %s236, %s237
      %p248 = scmp.eq.s32.totalorder %s32, 0
      %p249 = por %p247, %p248
      %p250 = scmp.ne.s32.totalorder %s236, %s237
      %p251 = scmp.eq.s32.totalorder %s33, 1
      %p252 = por %p250, %p251
      %p254 = scmp.ne.s32.totalorder %s237, %s253
      %p255 = scmp.eq.s32.totalorder %s33, 0
      %p256 = por %p254, %p255
      %s257 = ssub.s32 %s34, %s46
      %s258 = ssub.s32 %s35, %s42
      %s259 = sor.u32 %s257, %s258
      %p260 = scmp.eq.s32.totalorder %s259, 0
      %s262 = sadd.s32 %s261, 1
      %s263 = scalar_select %p260, %s261, %s262
      %p266 = pneg %p260
      %p267 = scmp.eq.s32.totalorder %s27, 1
      %p268 = por %p266, %p267
      %p269 = scmp.ne.s32.totalorder %s261, %s264
      %p270 = scmp.eq.s32.totalorder %s27, 0
      %p271 = por %p269, %p270
      %p272 = scmp.ne.s32.totalorder %s261, %s264
      %p273 = scmp.eq.s32.totalorder %s32, 1
      %p274 = por %p272, %p273
      %p275 = scmp.ne.s32.totalorder %s264, %s265
      %p276 = scmp.eq.s32.totalorder %s32, 0
      %p277 = por %p275, %p276
      %p278 = scmp.ne.s32.totalorder %s264, %s265
      %p279 = scmp.eq.s32.totalorder %s33, 1
      %p280 = por %p278, %p279
      %p282 = scmp.ne.s32.totalorder %s265, %s281
      %p283 = scmp.eq.s32.totalorder %s33, 0
      %p284 = por %p282, %p283
      %p285 = scmp.le.s32.totalorder 1, %s27
      %p286 = scmp.lt.s32.totalorder %s27, 3
      %p287 = pnand %p285, %p286
      %p288 = pneg %p287
      // Predicated region
      $region9: #{tpu_custom_call.1} parent=5 // pred_check
        _
      $region10: #{tpu_custom_call.1} parent=5 // pred_check_branch
        %290 = sbr.rel (%p287) target = $region12
      $region11: #{tpu_custom_call.1} parent=5 // pred_region
        %s291 = ssub.s32 %s27, 1
        // Predicated region
        $region13: #{tpu_custom_call.1} parent=11 // pred_check
          %p292 = pneg %p88
        $region14: #{tpu_custom_call.1} parent=11 // pred_check_branch
          %294 = sbr.rel (%p292) target = $region16
        $region15: #{tpu_custom_call.1} parent=11 // pred_region
          %296 = vsyncadd [#allocation6], 0
          %s297 = sshll.u32 %s1, 4
          %s298 = int_to_ptr.hbm [resolvable:$true] %s297
          %s299 = sshll.u32 [#allocation5], 4
          %s300 = int_to_ptr.vmem [resolvable:$true] %s299
          %305 = dma.hbm_to_vmem [thread:$0]  %s298, 1024, %s300, [#allocation6], 64, 64, 4
        $region16: #{tpu_custom_call.1} parent=11 // pred_fallthru
          _
        // Predicated region
        $region17: #{tpu_custom_call.1} parent=11 // pred_check
          %p306 = pneg %p109
        $region18: #{tpu_custom_call.1} parent=11 // pred_check_branch
          %308 = sbr.rel (%p306) target = $region20
        $region19: #{tpu_custom_call.1} parent=11 // pred_region
          _
        $region20: #{tpu_custom_call.1} parent=11 // pred_fallthru
          _
        // Predicated region
        $region21: #{tpu_custom_call.1} parent=11 // pred_check
          %p309 = pneg %p130
        $region22: #{tpu_custom_call.1} parent=11 // pred_check_branch
          %311 = sbr.rel (%p309) target = $region24
        $region23: #{tpu_custom_call.1} parent=11 // pred_region
          %313 = vsyncadd [#allocation6], 0
          %s314 = sshll.u32 %s3, 4
          %s315 = int_to_ptr.hbm [resolvable:$true] %s314
          %s316 = sshll.u32 [#allocation7], 4
          %s317 = int_to_ptr.vmem [resolvable:$true] %s316
          %322 = dma.hbm_to_vmem [thread:$0]  %s315, 1024, %s317, [#allocation6], 64, 64, 4
        $region24: #{tpu_custom_call.1} parent=11 // pred_fallthru
          _
        // Predicated region
        $region25: #{tpu_custom_call.1} parent=11 // pred_check
          %p323 = pneg %p151
        $region26: #{tpu_custom_call.1} parent=11 // pred_check_branch
          %325 = sbr.rel (%p323) target = $region28
        $region27: #{tpu_custom_call.1} parent=11 // pred_region
          _
        $region28: #{tpu_custom_call.1} parent=11 // pred_fallthru
          _
        // Predicated region
        $region29: #{tpu_custom_call.1} parent=11 // pred_check
          %p326 = pneg %p172
        $region30: #{tpu_custom_call.1} parent=11 // pred_check_branch
          %328 = sbr.rel (%p326) target = $region32
        $region31: #{tpu_custom_call.1} parent=11 // pred_region
          %330 = vsyncadd [#allocation9], 0
          %s331 = sshll.u32 %s5, 4
          %s332 = int_to_ptr.hbm [resolvable:$true] %s331
          %s333 = sshll.u32 [#allocation8], 4
          %s334 = int_to_ptr.vmem [resolvable:$true] %s333
          %339 = dma.hbm_to_vmem [thread:$0]  %s332, 1024, %s334, [#allocation9], 64, 64, 4
        $region32: #{tpu_custom_call.1} parent=11 // pred_fallthru
          _
        // Predicated region
        $region33: #{tpu_custom_call.1} parent=11 // pred_check
          %p340 = pneg %p193
        $region34: #{tpu_custom_call.1} parent=11 // pred_check_branch
          %342 = sbr.rel (%p340) target = $region36
        $region35: #{tpu_custom_call.1} parent=11 // pred_region
          _
        $region36: #{tpu_custom_call.1} parent=11 // pred_fallthru
          _
      $region12: #{tpu_custom_call.1} parent=5 // pred_fallthru
        _
      %p343 = scmp.lt.s32.totalorder %s27, 2
      // Predicated region
      $region37: #{tpu_custom_call.1} parent=5 // pred_check
        %p344 = pneg %p343
      $region38: #{tpu_custom_call.1} parent=5 // pred_check_branch
        %346 = sbr.rel (%p344) target = $region40
      $region39: #{tpu_custom_call.1} parent=5 // pred_region
        // Predicated region
        $region41: #{tpu_custom_call.1} parent=39 // pred_check
          %p347 = pneg %p61
        $region42: #{tpu_custom_call.1} parent=39 // pred_check_branch
          %349 = sbr.rel (%p347) target = $region44
        $region43: #{tpu_custom_call.1} parent=39 // pred_region
          %s350 = sand.u32 %s51, 1
          %s351 = scalar_lea.sflag [#allocation3], %s350
          %s352 = sand.u32 %s51, 1
          %s353 = smul.addr %s352, 4
          %s354 = scalar_lea.vmem [#allocation2], %s353
          %356 = vsyncadd %s351, 0
          %s357 = sadd.s32 %s35, %s34
          %s358 = smul.addr %s357, 4
          %s359 = scalar_lea.hbm %s0, %s358
          %s361 = sshll.u32 %s359, 4
          %s362 = int_to_ptr.hbm [resolvable:$true] %s361
          %s363 = sshll.u32 %s354, 4
          %s364 = int_to_ptr.vmem [resolvable:$true] %s363
          %366 = dma.hbm_to_vmem [thread:$0]  %s362, 64, %s364, %s351
        $region44: #{tpu_custom_call.1} parent=39 // pred_fallthru
          _
      $region40: #{tpu_custom_call.1} parent=5 // pred_fallthru
        _
      %p367 = scmp.le.s32.totalorder 1, %s27
      %p368 = scmp.lt.s32.totalorder %s27, 3
      %p369 = pnand %p367, %p368
      %p370 = pneg %p369
      // Predicated region
      $region45: #{tpu_custom_call.1} parent=5 // pred_check
        _
      $region46: #{tpu_custom_call.1} parent=5 // pred_check_branch
        %372 = sbr.rel (%p369) target = $region48
      $region47: #{tpu_custom_call.1} parent=5 // pred_region
        %s373 = ssub.s32 %s27, 1
        %s374 = sand.u32 %s54, 1
        %s375 = scalar_lea.sflag [#allocation3], %s374
        %s376 = sand.u32 %s54, 1
        %s377 = smul.addr %s376, 4
        %s378 = scalar_lea.vmem [#allocation2], %s377
        // Predicated region
        $region49: #{tpu_custom_call.1} parent=47 // pred_check
          %p379 = pneg %p67
        $region50: #{tpu_custom_call.1} parent=47 // pred_check_branch
          %381 = sbr.rel (%p379) target = $region52
        $region51: #{tpu_custom_call.1} parent=47 // pred_region
          %383 = dma.done %s375, 64
        $region52: #{tpu_custom_call.1} parent=47 // pred_fallthru
          _
        // Predicated region
        $region53: #{tpu_custom_call.1} parent=47 // pred_check
          %p384 = pneg %p88
        $region54: #{tpu_custom_call.1} parent=47 // pred_check_branch
          %386 = sbr.rel (%p384) target = $region56
        $region55: #{tpu_custom_call.1} parent=47 // pred_region
          %388 = dma.done [#allocation6], 1024
        $region56: #{tpu_custom_call.1} parent=47 // pred_fallthru
          _
        // Predicated region
        $region57: #{tpu_custom_call.1} parent=47 // pred_check
          %p389 = pneg %p130
        $region58: #{tpu_custom_call.1} parent=47 // pred_check_branch
          %391 = sbr.rel (%p389) target = $region60
        $region59: #{tpu_custom_call.1} parent=47 // pred_region
          %393 = dma.done [#allocation6], 1024
        $region60: #{tpu_custom_call.1} parent=47 // pred_fallthru
          _
        // Predicated region
        $region61: #{tpu_custom_call.1} parent=47 // pred_check
          %p394 = pneg %p172
        $region62: #{tpu_custom_call.1} parent=47 // pred_check_branch
          %396 = sbr.rel (%p394) target = $region64
        $region63: #{tpu_custom_call.1} parent=47 // pred_region
          %398 = dma.done [#allocation9], 1024
        $region64: #{tpu_custom_call.1} parent=47 // pred_fallthru
          _
        %s399 = sand.u32 %s54, 1
        %s400 = scalar_lea.sflag [#allocation3], %s399
        %s401 = sand.u32 %s54, 1
        %s402 = smul.addr %s401, 4
        %s403 = scalar_lea.vmem [#allocation2], %s402
        %p404 = pneg %p67
        %p405 = pneg %p64
        %p406 = pneg %p88
        %p407 = pneg %p85
        %p408 = pneg %p109
        %p409 = pneg %p106
        %p410 = pneg %p130
        %p411 = pneg %p127
        %p412 = pneg %p151
        %p413 = pneg %p148
        %p414 = pneg %p172
        %p415 = pneg %p169
        %p416 = pneg %p193
        %p417 = pneg %p190
        %p418 = pneg %p221
        %p419 = pneg %p218
        %s420 = sand.u32 %s208, 1
        %s421 = scalar_lea.sflag [#allocation4], %s420
        %s422 = sand.u32 %s208, 1
        %s423 = smul.addr %s422, 4
        %s424 = scalar_lea.vmem [#allocation10], %s423
        %p425 = pneg %p249
        %p426 = pneg %p246
        %s427 = sand.u32 %s32, 1
        %s428 = scalar_lea.sflag [#allocation12], %s427
        %s429 = sand.u32 %s236, 1
        %s430 = smul.addr %s429, 4
        %s431 = scalar_lea.vmem [#allocation11], %s430
        %p432 = pneg %p277
        %p433 = pneg %p274
        %s434 = sand.u32 %s32, 1
        %s435 = scalar_lea.sflag [#allocation12], %s434
        %s436 = sand.u32 %s264, 1
        %s437 = smul.addr %s436, 4
        %s438 = scalar_lea.vmem [#allocation13], %s437
        %v439 = vld [vmem:[%s378] sm:$0xf]
        %v440 = vld [vmem:[#allocation5] sm:$0xf]
        %v441 = vld [vmem:[#allocation5 + $0x4] sm:$0xf]
        %v442 = vld [vmem:[#allocation5 + $0x8] sm:$0xf]
        %v443 = vld [vmem:[#allocation5 + $0xc] sm:$0xf]
        %v444 = vld [vmem:[#allocation5 + $0x10] sm:$0xf]
        %v445 = vld [vmem:[#allocation5 + $0x14] sm:$0xf]
        %v446 = vld [vmem:[#allocation5 + $0x18] sm:$0xf]
        %v447 = vld [vmem:[#allocation5 + $0x1c] sm:$0xf]
        %v448 = vld [vmem:[#allocation5 + $0x20] sm:$0xf]
        %v449 = vld [vmem:[#allocation5 + $0x24] sm:$0xf]
        %v450 = vld [vmem:[#allocation5 + $0x28] sm:$0xf]
        %v451 = vld [vmem:[#allocation5 + $0x2c] sm:$0xf]
        %v452 = vld [vmem:[#allocation5 + $0x30] sm:$0xf]
        %v453 = vld [vmem:[#allocation5 + $0x34] sm:$0xf]
        %v454 = vld [vmem:[#allocation5 + $0x38] sm:$0xf]
        %v455 = vld [vmem:[#allocation5 + $0x3c] sm:$0xf]
        %v456 = vld [vmem:[%s2] sm:$0x1]
        %v458 = vperm.slane %v456, 0
        %v476 = vunpack.c.l.b16 %v440
        %v477 = vunpack.c.l.b16 %v441
        %v478 = vunpack.c.l.b16 %v442
        %v479 = vunpack.c.l.b16 %v443
        %v480 = vunpack.c.l.b16 %v444
        %v481 = vunpack.c.l.b16 %v445
        %v482 = vunpack.c.l.b16 %v446
        %v483 = vunpack.c.l.b16 %v447
        %v484 = vunpack.c.l.b16 %v448
        %v485 = vunpack.c.l.b16 %v449
        %v486 = vunpack.c.l.b16 %v450
        %v487 = vunpack.c.l.b16 %v451
        %v488 = vunpack.c.l.b16 %v452
        %v489 = vunpack.c.l.b16 %v453
        %v490 = vunpack.c.l.b16 %v454
        %v491 = vunpack.c.l.b16 %v455
        %v492 = vpack.c.b16 %v477, %v476
        %v493 = vpack.c.b16 %v479, %v478
        %v494 = vpack.c.b16 %v481, %v480
        %v495 = vpack.c.b16 %v483, %v482
        %v496 = vpack.c.b16 %v485, %v484
        %v497 = vpack.c.b16 %v487, %v486
        %v498 = vpack.c.b16 %v489, %v488
        %v499 = vpack.c.b16 %v491, %v490
        %508 = vmatpush.bf16.msra.mxu0 %v499
        %509 = vmatpush.bf16.msra.mxu0 %v498
        %510 = vmatpush.bf16.msra.mxu0 %v497
        %511 = vmatpush.bf16.msra.mxu0 %v496
        %512 = vmatpush.bf16.msra.mxu0 %v495
        %513 = vmatpush.bf16.msra.mxu0 %v494
        %514 = vmatpush.bf16.msra.mxu0 %v493
        %515 = vmatpush.bf16.msra.mxu0 %v492
        %516 = vmatmul.bf16.gmra.mxu0 %v439
        %v517 = vpop.f32.mrf.mxu0
        %v518 = vadd.f32 %v458, %v517
        %v519 = vpop.f32.mrf.mxu0
        %520 = vdwg.mxu0
        %v521 = vmul.f32 %v518, 0.17677669
        %v522 = vpack.c.bf16 %v521, %v521
        %523 = vst [vmem:[%s424] sm:$0xf] %v522
        %v524 = vld [vmem:[#allocation7] sm:$0xf]
        %v525 = vld [vmem:[#allocation7 + $0x4] sm:$0xf]
        %v526 = vld [vmem:[#allocation7 + $0x8] sm:$0xf]
        %v527 = vld [vmem:[#allocation7 + $0xc] sm:$0xf]
        %v528 = vld [vmem:[#allocation7 + $0x10] sm:$0xf]
        %v529 = vld [vmem:[#allocation7 + $0x14] sm:$0xf]
        %v530 = vld [vmem:[#allocation7 + $0x18] sm:$0xf]
        %v531 = vld [vmem:[#allocation7 + $0x1c] sm:$0xf]
        %v532 = vld [vmem:[#allocation7 + $0x20] sm:$0xf]
        %v533 = vld [vmem:[#allocation7 + $0x24] sm:$0xf]
        %v534 = vld [vmem:[#allocation7 + $0x28] sm:$0xf]
        %v535 = vld [vmem:[#allocation7 + $0x2c] sm:$0xf]
        %v536 = vld [vmem:[#allocation7 + $0x30] sm:$0xf]
        %v537 = vld [vmem:[#allocation7 + $0x34] sm:$0xf]
        %v538 = vld [vmem:[#allocation7 + $0x38] sm:$0xf]
        %v539 = vld [vmem:[#allocation7 + $0x3c] sm:$0xf]
        %v540 = vld [vmem:[%s4] sm:$0x1]
        %v542 = vperm.slane %v540, 0
        %v560 = vunpack.c.l.b16 %v524
        %v561 = vunpack.c.l.b16 %v525
        %v562 = vunpack.c.l.b16 %v526
        %v563 = vunpack.c.l.b16 %v527
        %v564 = vunpack.c.l.b16 %v528
        %v565 = vunpack.c.l.b16 %v529
        %v566 = vunpack.c.l.b16 %v530
        %v567 = vunpack.c.l.b16 %v531
        %v568 = vunpack.c.l.b16 %v532
        %v569 = vunpack.c.l.b16 %v533
        %v570 = vunpack.c.l.b16 %v534
        %v571 = vunpack.c.l.b16 %v535
        %v572 = vunpack.c.l.b16 %v536
        %v573 = vunpack.c.l.b16 %v537
        %v574 = vunpack.c.l.b16 %v538
        %v575 = vunpack.c.l.b16 %v539
        %v576 = vpack.c.b16 %v561, %v560
        %v577 = vpack.c.b16 %v563, %v562
        %v578 = vpack.c.b16 %v565, %v564
        %v579 = vpack.c.b16 %v567, %v566
        %v580 = vpack.c.b16 %v569, %v568
        %v581 = vpack.c.b16 %v571, %v570
        %v582 = vpack.c.b16 %v573, %v572
        %v583 = vpack.c.b16 %v575, %v574
        %592 = vmatpush.bf16.msra.mxu0 %v583
        %593 = vmatpush.bf16.msra.mxu0 %v582
        %594 = vmatpush.bf16.msra.mxu0 %v581
        %595 = vmatpush.bf16.msra.mxu0 %v580
        %596 = vmatpush.bf16.msra.mxu0 %v579
        %597 = vmatpush.bf16.msra.mxu0 %v578
        %598 = vmatpush.bf16.msra.mxu0 %v577
        %599 = vmatpush.bf16.msra.mxu0 %v576
        %600 = vmatmul.bf16.gmra.mxu0 %v439
        %v601 = vpop.f32.mrf.mxu0
        %v602 = vadd.f32 %v542, %v601
        %v603 = vpop.f32.mrf.mxu0
        %604 = vdwg.mxu0
        %v605 = vpack.c.bf16 %v602, %v602
        %606 = vst [vmem:[%s431] sm:$0xf] %v605
        %v607 = vld [vmem:[#allocation8] sm:$0xf]
        %v608 = vld [vmem:[#allocation8 + $0x4] sm:$0xf]
        %v609 = vld [vmem:[#allocation8 + $0x8] sm:$0xf]
        %v610 = vld [vmem:[#allocation8 + $0xc] sm:$0xf]
        %v611 = vld [vmem:[#allocation8 + $0x10] sm:$0xf]
        %v612 = vld [vmem:[#allocation8 + $0x14] sm:$0xf]
        %v613 = vld [vmem:[#allocation8 + $0x18] sm:$0xf]
        %v614 = vld [vmem:[#allocation8 + $0x1c] sm:$0xf]
        %v615 = vld [vmem:[#allocation8 + $0x20] sm:$0xf]
        %v616 = vld [vmem:[#allocation8 + $0x24] sm:$0xf]
        %v617 = vld [vmem:[#allocation8 + $0x28] sm:$0xf]
        %v618 = vld [vmem:[#allocation8 + $0x2c] sm:$0xf]
        %v619 = vld [vmem:[#allocation8 + $0x30] sm:$0xf]
        %v620 = vld [vmem:[#allocation8 + $0x34] sm:$0xf]
        %v621 = vld [vmem:[#allocation8 + $0x38] sm:$0xf]
        %v622 = vld [vmem:[#allocation8 + $0x3c] sm:$0xf]
        %v623 = vld [vmem:[%s6] sm:$0x1]
        %v625 = vperm.slane %v623, 0
        %v643 = vunpack.c.l.b16 %v607
        %v644 = vunpack.c.l.b16 %v608
        %v645 = vunpack.c.l.b16 %v609
        %v646 = vunpack.c.l.b16 %v610
        %v647 = vunpack.c.l.b16 %v611
        %v648 = vunpack.c.l.b16 %v612
        %v649 = vunpack.c.l.b16 %v613
        %v650 = vunpack.c.l.b16 %v614
        %v651 = vunpack.c.l.b16 %v615
        %v652 = vunpack.c.l.b16 %v616
        %v653 = vunpack.c.l.b16 %v617
        %v654 = vunpack.c.l.b16 %v618
        %v655 = vunpack.c.l.b16 %v619
        %v656 = vunpack.c.l.b16 %v620
        %v657 = vunpack.c.l.b16 %v621
        %v658 = vunpack.c.l.b16 %v622
        %v659 = vpack.c.b16 %v644, %v643
        %v660 = vpack.c.b16 %v646, %v645
        %v661 = vpack.c.b16 %v648, %v647
        %v662 = vpack.c.b16 %v650, %v649
        %v663 = vpack.c.b16 %v652, %v651
        %v664 = vpack.c.b16 %v654, %v653
        %v665 = vpack.c.b16 %v656, %v655
        %v666 = vpack.c.b16 %v658, %v657
        %675 = vmatpush.bf16.msra.mxu0 %v666
        %676 = vmatpush.bf16.msra.mxu0 %v665
        %677 = vmatpush.bf16.msra.mxu0 %v664
        %678 = vmatpush.bf16.msra.mxu0 %v663
        %679 = vmatpush.bf16.msra.mxu0 %v662
        %680 = vmatpush.bf16.msra.mxu0 %v661
        %681 = vmatpush.bf16.msra.mxu0 %v660
        %682 = vmatpush.bf16.msra.mxu0 %v659
        %683 = vmatmul.bf16.gmra.mxu0 %v439
        %v684 = vpop.f32.mrf.mxu0
        %v685 = vadd.f32 %v625, %v684
        %v686 = vpop.f32.mrf.mxu0
        %687 = vdwg.mxu0
        %v688 = vpack.c.bf16 %v685, %v685
        %689 = vst [vmem:[%s438] sm:$0xf] %v688
        %s690 = sand.u32 %s208, 1
        %s691 = scalar_lea.sflag [#allocation4], %s690
        %s692 = sand.u32 %s208, 1
        %s693 = smul.addr %s692, 4
        %s694 = scalar_lea.vmem [#allocation10], %s693
        %s695 = sand.u32 %s32, 1
        %s696 = scalar_lea.sflag [#allocation12], %s695
        %s697 = sand.u32 %s236, 1
        %s698 = smul.addr %s697, 4
        %s699 = scalar_lea.vmem [#allocation11], %s698
        %s700 = sand.u32 %s32, 1
        %s701 = scalar_lea.sflag [#allocation12], %s700
        %s702 = sand.u32 %s264, 1
        %s703 = smul.addr %s702, 4
        %s704 = scalar_lea.vmem [#allocation13], %s703
        // Predicated region
        $region65: #{tpu_custom_call.1} parent=47 // pred_check
          %p705 = pneg %p218
        $region66: #{tpu_custom_call.1} parent=47 // pred_check_branch
          %707 = sbr.rel (%p705) target = $region68
        $region67: #{tpu_custom_call.1} parent=47 // pred_region
          %709 = vsyncadd %s691, 0
          %s710 = sadd.s32 %s37, %s36
          %s711 = smul.addr %s710, 4
          %s712 = scalar_lea.hbm %s7, %s711
          %s714 = sshll.u32 %s694, 4
          %s715 = int_to_ptr.vmem [resolvable:$true] %s714
          %s716 = sshll.u32 %s712, 4
          %s717 = int_to_ptr.hbm [resolvable:$true] %s716
          %719 = dma.vmem_to_hbm [thread:$0]  %s715, 64, %s717, %s691
        $region68: #{tpu_custom_call.1} parent=47 // pred_fallthru
          _
        // Predicated region
        $region69: #{tpu_custom_call.1} parent=47 // pred_check
          %p720 = pneg %p246
        $region70: #{tpu_custom_call.1} parent=47 // pred_check_branch
          %722 = sbr.rel (%p720) target = $region72
        $region71: #{tpu_custom_call.1} parent=47 // pred_region
          %724 = vsyncadd %s696, 0
          %s725 = sadd.s32 %s37, %s36
          %s726 = smul.addr %s725, 4
          %s727 = scalar_lea.hbm %s8, %s726
          %s729 = sshll.u32 %s699, 4
          %s730 = int_to_ptr.vmem [resolvable:$true] %s729
          %s731 = sshll.u32 %s727, 4
          %s732 = int_to_ptr.hbm [resolvable:$true] %s731
          %734 = dma.vmem_to_hbm [thread:$0]  %s730, 64, %s732, %s696
        $region72: #{tpu_custom_call.1} parent=47 // pred_fallthru
          _
        // Predicated region
        $region73: #{tpu_custom_call.1} parent=47 // pred_check
          %p735 = pneg %p274
        $region74: #{tpu_custom_call.1} parent=47 // pred_check_branch
          %737 = sbr.rel (%p735) target = $region76
        $region75: #{tpu_custom_call.1} parent=47 // pred_region
          %739 = vsyncadd %s701, 0
          %s740 = sadd.s32 %s37, %s36
          %s741 = smul.addr %s740, 4
          %s742 = scalar_lea.hbm %s9, %s741
          %s744 = sshll.u32 %s704, 4
          %s745 = int_to_ptr.vmem [resolvable:$true] %s744
          %s746 = sshll.u32 %s742, 4
          %s747 = int_to_ptr.hbm [resolvable:$true] %s746
          %749 = dma.vmem_to_hbm [thread:$0]  %s745, 64, %s747, %s701
        $region76: #{tpu_custom_call.1} parent=47 // pred_fallthru
          _
      $region48: #{tpu_custom_call.1} parent=5 // pred_fallthru
        _
      %p750 = scmp.le.s32.totalorder 2, %s27
      // Predicated region
      $region77: #{tpu_custom_call.1} parent=5 // pred_check
        %p751 = pneg %p750
      $region78: #{tpu_custom_call.1} parent=5 // pred_check_branch
        %753 = sbr.rel (%p751) target = $region80
      $region79: #{tpu_custom_call.1} parent=5 // pred_region
        %s754 = ssub.s32 %s27, 2
        // Predicated region
        $region81: #{tpu_custom_call.1} parent=79 // pred_check
          %p755 = pneg %p224
        $region82: #{tpu_custom_call.1} parent=79 // pred_check_branch
          %757 = sbr.rel (%p755) target = $region84
        $region83: #{tpu_custom_call.1} parent=79 // pred_region
          %s758 = sand.u32 %s209, 1
          %s759 = scalar_lea.sflag [#allocation4], %s758
          %s760 = sand.u32 %s209, 1
          %s761 = smul.addr %s760, 4
          %s762 = scalar_lea.vmem [#allocation10], %s761
          %764 = dma.done %s759, 64
        $region84: #{tpu_custom_call.1} parent=79 // pred_fallthru
          _
        // Predicated region
        $region85: #{tpu_custom_call.1} parent=79 // pred_check
          %p765 = pneg %p252
        $region86: #{tpu_custom_call.1} parent=79 // pred_check_branch
          %767 = sbr.rel (%p765) target = $region88
        $region87: #{tpu_custom_call.1} parent=79 // pred_region
          %s768 = sand.u32 %s33, 1
          %s769 = scalar_lea.sflag [#allocation12], %s768
          %s770 = sand.u32 %s237, 1
          %s771 = smul.addr %s770, 4
          %s772 = scalar_lea.vmem [#allocation11], %s771
          %774 = dma.done %s769, 64
        $region88: #{tpu_custom_call.1} parent=79 // pred_fallthru
          _
        // Predicated region
        $region89: #{tpu_custom_call.1} parent=79 // pred_check
          %p775 = pneg %p280
        $region90: #{tpu_custom_call.1} parent=79 // pred_check_branch
          %777 = sbr.rel (%p775) target = $region92
        $region91: #{tpu_custom_call.1} parent=79 // pred_region
          %s778 = sand.u32 %s33, 1
          %s779 = scalar_lea.sflag [#allocation12], %s778
          %s780 = sand.u32 %s265, 1
          %s781 = smul.addr %s780, 4
          %s782 = scalar_lea.vmem [#allocation13], %s781
          %784 = dma.done %s779, 64
        $region92: #{tpu_custom_call.1} parent=79 // pred_fallthru
          _
      $region80: #{tpu_custom_call.1} parent=5 // pred_fallthru
        _
    $region6: #{tpu_custom_call.1} parent=1 // loop_footer
      %s31 = sadd.s32 1, %s27
    $region7: #{tpu_custom_call.1} parent=1 // loop_footer_branch
      %26 = sbr.rel target = $region3
    $region8: #{tpu_custom_call.1} parent=1 // loop_exit
      _
    %785 = vsyncpa [#allocation3], 1
    %s786 = scalar_lea.sflag [#allocation3], 1
    %787 = vsyncpa %s786, 1
    %788 = vsyncpa [#allocation6], 1
    %789 = vsyncpa [#allocation9], 1
    %790 = vsyncpa [#allocation4], 1
    %s791 = scalar_lea.sflag [#allocation4], 1
    %792 = vsyncpa %s791, 1
    %793 = vsyncpa [#allocation12], 1
    %s794 = scalar_lea.sflag [#allocation12], 1
    %795 = vsyncpa %s794, 1

</llo_original>
